<compile_context>
chip_gen: v6e
topology: v6e:2x2x1
jax: 0.10.0
libtpu: 0.0.40
codegen_flags: <defaults>
</compile_context>

<pallas_src>
import functools

import jax
import jax.numpy as jnp
from jax.experimental import pallas as pl
from jax.experimental.pallas import tpu as pltpu


def _round_up(x: int, m: int) -> int:
    return ((x + m - 1) // m) * m


# ---------------------------------------------------------------------------
# Kernels
# ---------------------------------------------------------------------------
def _t2v_kernel(tau_ref, w_ref, b_ref, mask_ref, o_ref, *, f):
    """out = where(mask, f(tau*w + b), tau*w + b)   (concat fused via packed w/b)."""
    tau = tau_ref[...].astype(jnp.float32)          # (tb, 1)
    z = tau * w_ref[...] + b_ref[...]               # (tb, Hp)  VPU broadcast MAC
    act = jnp.where(mask_ref[...] > 0.5, f(z), z)   # periodic vs. linear columns
    o_ref[...] = act.astype(o_ref.dtype)


def _t2v_fc1_kernel(tau_ref, w_ref, b_ref, mask_ref, wfc_ref, bfc_ref, o_ref, *, f):
    """Same as above, plus fused fc1: out = act @ Wfc + bfc (single MXU matmul)."""
    tau = tau_ref[...].astype(jnp.float32)          # (tb, 1)
    z = tau * w_ref[...] + b_ref[...]               # (tb, Hp)
    act = jnp.where(mask_ref[...] > 0.5, f(z), z)   # (tb, Hp), stays in VMEM/regs
    out = jnp.dot(act, wfc_ref[...], preferred_element_type=jnp.float32)
    out = out + bfc_ref[...]                        # (tb, Op)
    o_ref[...] = out.astype(o_ref.dtype)


# ---------------------------------------------------------------------------
# Wrapper (parameter packing + pallas_call)
# ---------------------------------------------------------------------------
def time2vec_forward(tau, w, b, w0, b0, fc1_w=None, fc1_b=None, *,
                     activation="sin", output_size=0, batch_tile=512):
    """Forward pass of Model.

    tau:   (B, 1)
    w:     (1, hidden_dim - 1)   b:  (hidden_dim - 1,)
    w0:    (1, 1)                b0: (1,)
    fc1_w: (output_size, hidden_dim)  [PyTorch nn.Linear layout]   (if output_size != 0)
    fc1_b: (output_size,)
    """
    f = jnp.sin if activation == "sin" else jnp.cos

    B = tau.shape[0]
    H = w.shape[1] + 1                      # hidden_dim
    Hp = _round_up(H, 128)                  # lane-dense hidden width

    # Pack [w | w0 | 0-pad] and [b | b0 | 0-pad] into single lane-dense rows.
    w_full = jnp.zeros((1, Hp), jnp.float32)
    w_full = w_full.at[0, : H - 1].set(w[0].astype(jnp.float32))
    w_full = w_full.at[0, H - 1].set(w0[0, 0].astype(jnp.float32))
    b_full = jnp.zeros((1, Hp), jnp.float32)
    b_full = b_full.at[0, : H - 1].set(b.astype(jnp.float32))
    b_full = b_full.at[0, H - 1].set(b0[0].astype(jnp.float32))
    mask = jnp.zeros((1, Hp), jnp.float32).at[0, : H - 1].set(1.0)  # 1 => periodic f()

    # Batch tiling: rows multiple of 8, large resident-weight tiles.
    tb = min(batch_tile, _round_up(B, 8))
    Bp = _round_up(B, tb)
    tau_p = jnp.zeros((Bp, 1), jnp.float32).at[:B, :].set(tau.astype(jnp.float32))
    grid = (Bp // tb,)

    weight_spec = pl.BlockSpec((1, Hp), lambda i: (0, 0))   # VMEM-resident, DMA'd once
    tau_spec = pl.BlockSpec((tb, 1), lambda i: (i, 0))

    if output_size != 0:
        O = fc1_w.shape[0]
        Op = _round_up(O, 128)
        wfc = jnp.zeros((Hp, Op), jnp.float32).at[:H, :O].set(
            fc1_w.T.astype(jnp.float32))
        bfc = jnp.zeros((1, Op), jnp.float32).at[0, :O].set(fc1_b.astype(jnp.float32))

        out = pl.pallas_call(
            functools.partial(_t2v_fc1_kernel, f=f),
            out_shape=jax.ShapeDtypeStruct((Bp, Op), jnp.float32),
            grid_spec=pltpu.PrefetchScalarGridSpec(
                num_scalar_prefetch=0,
                grid=grid,
                in_specs=[
                    tau_spec,
                    weight_spec,                                   # w_full
                    weight_spec,                                   # b_full
                    weight_spec,                                   # mask
                    pl.BlockSpec((Hp, Op), lambda i: (0, 0)),      # fc1 weight
                    pl.BlockSpec((1, Op), lambda i: (0, 0)),       # fc1 bias
                ],
                out_specs=pl.BlockSpec((tb, Op), lambda i: (i, 0)),
            ),
            compiler_params=pltpu.CompilerParams(
                dimension_semantics=("parallel",)),
        )(tau_p, w_full, b_full, mask, wfc, bfc)
        return out[:B, :O]

    out = pl.pallas_call(
        functools.partial(_t2v_kernel, f=f),
        out_shape=jax.ShapeDtypeStruct((Bp, Hp), jnp.float32),
        grid_spec=pltpu.PrefetchScalarGridSpec(
            num_scalar_prefetch=0,
            grid=grid,
            in_specs=[tau_spec, weight_spec, weight_spec, weight_spec],
            out_specs=pl.BlockSpec((tb, Hp), lambda i: (i, 0)),
        ),
        compiler_params=pltpu.CompilerParams(
            dimension_semantics=("parallel",)),
    )(tau_p, w_full, b_full, mask)
    return out[:B, :H]


# ---------------------------------------------------------------------------
# Pure-JAX reference (mirrors the PyTorch Model forward)
# ---------------------------------------------------------------------------
def _reference(tau, w, b, w0, b0, fc1_w, fc1_b, activation, output_size):
    f = jnp.sin if activation == "sin" else jnp.cos
    v1 = f(tau @ w + b)                     # (B, H-1)
    v2 = tau @ w0 + b0                      # (B, 1)
    x = jnp.concatenate([v1, v2], axis=1)   # (B, H)  -- same order as t2v()
    if output_size != 0:
        x = x @ fc1_w.T + fc1_b
    return x


if __name__ == "__main__":
    key = jax.random.PRNGKey(0)
    ks = jax.random.split(key, 8)

    batch = 16
    hidden_dim = 32
    output_size = 16
    activation = "sin"

    tau = jax.random.normal(ks[0], (batch, 1), jnp.float32) * 10.0
    w = jax.random.normal(ks[1], (1, hidden_dim - 1), jnp.float32)
    b = jax.random.normal(ks[2], (hidden_dim - 1,), jnp.float32)
    w0 = jax.random.normal(ks[3], (1, 1), jnp.float32)
    b0 = jax.random.normal(ks[4], (1,), jnp.float32)
    fc1_w = jax.random.normal(ks[5], (output_size, hidden_dim), jnp.float32) * 0.1
    fc1_b = jax.random.normal(ks[6], (output_size,), jnp.float32) * 0.1

    # Case 1: output_size != 0 (fc1 fused into the kernel).
    out = time2vec_forward(tau, w, b, w0, b0, fc1_w, fc1_b,
                           activation=activation, output_size=output_size)
    out = jax.block_until_ready(out)
    ref = _reference(tau, w, b, w0, b0, fc1_w, fc1_b, activation, output_size)
    assert out.shape == (batch, output_size)
    assert jnp.allclose(out, ref, rtol=1e-4, atol=1e-4), "fc1 path mismatch"

    # Case 2: output_size == 0 (Time2Vec embedding only).
    out2 = time2vec_forward(tau, w, b, w0, b0,
                            activation="cos", output_size=0)
    out2 = jax.block_until_ready(out2)
    ref2 = _reference(tau, w, b, w0, b0, None, None, "cos", 0)
    assert out2.shape == (batch, hidden_dim)
    assert jnp.allclose(out2, ref2, rtol=1e-4, atol=1e-4), "embedding path mismatch"

    print("KERNEL_OK")
</pallas_src>

<mosaic_0001>
module attributes {stable_mosaic.version = 11 : i64} {
  func.func @_t2v_fc1_kernel(%arg0: i32, %arg1: memref<16x1xf32, #tpu.memory_space<vmem>>, %arg2: memref<1x128xf32, #tpu.memory_space<vmem>>, %arg3: memref<1x128xf32, #tpu.memory_space<vmem>>, %arg4: memref<1x128xf32, #tpu.memory_space<vmem>>, %arg5: memref<128x128xf32, #tpu.memory_space<vmem>>, %arg6: memref<1x128xf32, #tpu.memory_space<vmem>>, %arg7: memref<16x128xf32, #tpu.memory_space<vmem>>) attributes {dimension_semantics = [#tpu.dimension_semantics<parallel>], iteration_bounds = array<i64: 1>, scalar_prefetch = 0 : i64, scratch_operands = 0 : i64, tpu.core_type = #tpu.core_type<tc>, window_params = [{transform_indices = @transform_0, window_bounds = array<i64: 16, 1>}, {pipeline_mode = #tpu.pipeline_mode<synchronous>, transform_indices = @transform_1, window_bounds = array<i64: 1, 128>}, {pipeline_mode = #tpu.pipeline_mode<synchronous>, transform_indices = @transform_2, window_bounds = array<i64: 1, 128>}, {pipeline_mode = #tpu.pipeline_mode<synchronous>, transform_indices = @transform_3, window_bounds = array<i64: 1, 128>}, {pipeline_mode = #tpu.pipeline_mode<synchronous>, transform_indices = @transform_4, window_bounds = array<i64: 128, 128>}, {pipeline_mode = #tpu.pipeline_mode<synchronous>, transform_indices = @transform_5, window_bounds = array<i64: 1, 128>}, {transform_indices = @transform_6, window_bounds = array<i64: 16, 128>}]} {
    %c0 = arith.constant 0 : index
    %c0_0 = arith.constant 0 : index
    %0 = vector.load %arg1[%c0, %c0_0] : memref<16x1xf32, #tpu.memory_space<vmem>>, vector<16x1xf32>
    %c0_1 = arith.constant 0 : index
    %c0_2 = arith.constant 0 : index
    %1 = vector.load %arg2[%c0_1, %c0_2] : memref<1x128xf32, #tpu.memory_space<vmem>>, vector<1x128xf32>
    %2 = vector.broadcast %0 : vector<16x1xf32> to vector<16x128xf32>
    %3 = vector.broadcast %1 : vector<1x128xf32> to vector<16x128xf32>
    %4 = arith.mulf %2, %3 : vector<16x128xf32>
    %c0_3 = arith.constant 0 : index
    %c0_4 = arith.constant 0 : index
    %5 = vector.load %arg3[%c0_3, %c0_4] : memref<1x128xf32, #tpu.memory_space<vmem>>, vector<1x128xf32>
    %6 = vector.broadcast %5 : vector<1x128xf32> to vector<16x128xf32>
    %7 = arith.addf %4, %6 : vector<16x128xf32>
    %c0_5 = arith.constant 0 : index
    %c0_6 = arith.constant 0 : index
    %8 = vector.load %arg4[%c0_5, %c0_6] : memref<1x128xf32, #tpu.memory_space<vmem>>, vector<1x128xf32>
    %cst = arith.constant 5.000000e-01 : f32
    %9 = vector.broadcast %cst : f32 to vector<1x128xf32>
    %10 = arith.cmpf ogt, %8, %9 : vector<1x128xf32>
    %11 = math.sin %7 : vector<16x128xf32>
    %12 = vector.shape_cast %10 : vector<1x128xi1> to vector<1x128xi1>
    %13 = vector.broadcast %12 : vector<1x128xi1> to vector<16x128xi1>
    %14 = arith.select %13, %11, %7 : vector<16x128xi1>, vector<16x128xf32>
    %c0_7 = arith.constant 0 : index
    %c0_8 = arith.constant 0 : index
    %15 = vector.load %arg5[%c0_7, %c0_8] : memref<128x128xf32, #tpu.memory_space<vmem>>, vector<128x128xf32>
    %cst_9 = arith.constant dense<0.000000e+00> : vector<16x128xf32>
    %16 = tpu.matmul %14, %15, %cst_9 {dimension_numbers = #tpu.dot_dimension_numbers<[1], [0], [0], [1], [0, 0, 1, 1], [], []>} : vector<16x128xf32>, vector<128x128xf32>, vector<16x128xf32> -> vector<16x128xf32>
    %c0_10 = arith.constant 0 : index
    %c0_11 = arith.constant 0 : index
    %17 = vector.load %arg6[%c0_10, %c0_11] : memref<1x128xf32, #tpu.memory_space<vmem>>, vector<1x128xf32>
    %18 = vector.broadcast %17 : vector<1x128xf32> to vector<16x128xf32>
    %19 = arith.addf %16, %18 : vector<16x128xf32>
    %c0_12 = arith.constant 0 : index
    %c0_13 = arith.constant 0 : index
    %20 = vector.load %arg7[%c0_12, %c0_13] : memref<16x128xf32, #tpu.memory_space<vmem>>, vector<16x128xf32>
    tpu.vector_store %arg7[%c0_12, %c0_13], %19 {strides = array<i32>} : memref<16x128xf32, #tpu.memory_space<vmem>>, vector<16x128xf32>,
    return
  }
  func.func @transform_0(%arg0: i32) -> (i32, i32) {
    %c0_i32 = arith.constant 0 : i32
    %c0_i32_0 = arith.constant 0 : i32
    return %arg0, %c0_i32 : i32, i32
  }
  func.func @transform_1(%arg0: i32) -> (i32, i32) {
    %c0_i32 = arith.constant 0 : i32
    %c0_i32_0 = arith.constant 0 : i32
    %c0_i32_1 = arith.constant 0 : i32
    return %c0_i32, %c0_i32_0 : i32, i32
  }
  func.func @transform_2(%arg0: i32) -> (i32, i32) {
    %c0_i32 = arith.constant 0 : i32
    %c0_i32_0 = arith.constant 0 : i32
    %c0_i32_1 = arith.constant 0 : i32
    return %c0_i32, %c0_i32_0 : i32, i32
  }
  func.func @transform_3(%arg0: i32) -> (i32, i32) {
    %c0_i32 = arith.constant 0 : i32
    %c0_i32_0 = arith.constant 0 : i32
    %c0_i32_1 = arith.constant 0 : i32
    return %c0_i32, %c0_i32_0 : i32, i32
  }
  func.func @transform_4(%arg0: i32) -> (i32, i32) {
    %c0_i32 = arith.constant 0 : i32
    %c0_i32_0 = arith.constant 0 : i32
    %c0_i32_1 = arith.constant 0 : i32
    return %c0_i32, %c0_i32_0 : i32, i32
  }
  func.func @transform_5(%arg0: i32) -> (i32, i32) {
    %c0_i32 = arith.constant 0 : i32
    %c0_i32_0 = arith.constant 0 : i32
    %c0_i32_1 = arith.constant 0 : i32
    return %c0_i32, %c0_i32_0 : i32, i32
  }
  func.func @transform_6(%arg0: i32) -> (i32, i32) {
    %c0_i32 = arith.constant 0 : i32
    %c0_i32_0 = arith.constant 0 : i32
    return %arg0, %c0_i32 : i32, i32
  }
}

</mosaic_0001>

<llo_original>
// kernel: tpu_custom_call.1
$region0: #{tpu_custom_call.1}
  #allocation0 [shape = 'u32[]', space=smem, size = 0x4, offset = 0x4, fixed_abs, tag = 'smem constant byte address 0x4 - core index']
  #allocation1 [shape = 'u32[144,128]{1,0:T(1,128)}', space=vmem, size = 0x12000, scoped, tag = 'internal scratch']
  %s0 = inlined_call_operand.vmem [shape: f32[16,1], index: 0, kind: input, shape index: {}]
  %s1 = inlined_call_operand.vmem [shape: f32[1,128], index: 1, kind: input, shape index: {}]
  %s2 = inlined_call_operand.vmem [shape: f32[1,128], index: 2, kind: input, shape index: {}]
  %s3 = inlined_call_operand.vmem [shape: f32[1,128], index: 3, kind: input, shape index: {}]
  %s4 = inlined_call_operand.hbm [shape: f32[128,128], index: 4, kind: input, shape index: {}]
  %s5 = inlined_call_operand.vmem [shape: f32[1,128], index: 5, kind: input, shape index: {}]
  %s6 = inlined_call_operand.hbm [shape: f32[16,128], index: 6, kind: output, shape index: {}]
  %s7 = sld [smem:[#allocation0]]
  $region38: #{tpu_custom_call.1} parent=0
    _
  %s9 = ssub.s32 1, %s7
  %s10 = scalar_select 0, %s9, %s7
  $region1: #{tpu_custom_call.1} parent=0
    #allocation2 [shape = 'u8[65536]{0}', space=vmem, size = 0x10000, scoped, tag = 'input window, operand 4, single buffered']
    #allocation3 [shape = 's32[1]{0}', space=sflag, size = 0x4, scoped, tag = 'scoped memory for tpu_custom_call.1']
    #allocation4 [shape = 's32[1]{0}', space=sflag, size = 0x4, scoped, tag = 'scoped memory for tpu_custom_call.1']
    #allocation5 [shape = 'u8[8192]{0}', space=vmem, size = 0x2000, scoped, tag = 'output window, operand 0, single buffered']
    %11 = vsyncpa [#allocation3], 0
    %12 = vsyncpa [#allocation4], 0
    // Predicated region
    $region2: #{tpu_custom_call.1} parent=1 // pred_check
      _
    $region3: #{tpu_custom_call.1} parent=1 // pred_check_branch
      %14 = sbr.rel (0) target = $region5
    $region4: #{tpu_custom_call.1} parent=1 // pred_region
      _
    $region5: #{tpu_custom_call.1} parent=1 // pred_fallthru
      _
    // Predicated region
    $region6: #{tpu_custom_call.1} parent=1 // pred_check
      _
    $region7: #{tpu_custom_call.1} parent=1 // pred_check_branch
      %16 = sbr.rel (0) target = $region9
    $region8: #{tpu_custom_call.1} parent=1 // pred_region
      _
    $region9: #{tpu_custom_call.1} parent=1 // pred_fallthru
      _
    // Predicated region
    $region10: #{tpu_custom_call.1} parent=1 // pred_check
      _
    $region11: #{tpu_custom_call.1} parent=1 // pred_check_branch
      %18 = sbr.rel (0) target = $region13
    $region12: #{tpu_custom_call.1} parent=1 // pred_region
      _
    $region13: #{tpu_custom_call.1} parent=1 // pred_fallthru
      _
    // Predicated region
    $region14: #{tpu_custom_call.1} parent=1 // pred_check
      _
    $region15: #{tpu_custom_call.1} parent=1 // pred_check_branch
      %20 = sbr.rel (0) target = $region17
    $region16: #{tpu_custom_call.1} parent=1 // pred_region
      _
    $region17: #{tpu_custom_call.1} parent=1 // pred_fallthru
      _
    // Predicated region
    $region18: #{tpu_custom_call.1} parent=1 // pred_check
      _
    $region19: #{tpu_custom_call.1} parent=1 // pred_check_branch
      %22 = sbr.rel (0) target = $region21
    $region20: #{tpu_custom_call.1} parent=1 // pred_region
      %s24 = ssub.s32 2048, 2048
      %25 = vsyncadd [#allocation3], %s24
      %s26 = sshll.u32 [#allocation2], 4
      %s27 = int_to_ptr.vmem [resolvable:$true] %s26
      %32 = dma.hbm_to_vmem [thread:$0]  %s4, 2048, %s27, [#allocation3], 128, 128, 8
    $region21: #{tpu_custom_call.1} parent=1 // pred_fallthru
      _
    // Predicated region
    $region22: #{tpu_custom_call.1} parent=1 // pred_check
      _
    $region23: #{tpu_custom_call.1} parent=1 // pred_check_branch
      %34 = sbr.rel (0) target = $region25
    $region24: #{tpu_custom_call.1} parent=1 // pred_region
      _
    $region25: #{tpu_custom_call.1} parent=1 // pred_fallthru
      _
    // Predicated region
    $region26: #{tpu_custom_call.1} parent=1 // pred_check
      _
    $region27: #{tpu_custom_call.1} parent=1 // pred_check_branch
      %36 = sbr.rel (0) target = $region29
    $region28: #{tpu_custom_call.1} parent=1 // pred_region
      %37 = dma.done [#allocation3], 2048
    $region29: #{tpu_custom_call.1} parent=1 // pred_fallthru
      _
    %v38 = vld [vmem:[%s0] sm:$0xff]
    %v39 = vld [vmem:[%s0 + $0x8] sm:$0xff]
    %v40 = vld [vmem:[%s1] sm:$0x1]
    %42 = vset.pattern.permute.xlu0 0
    %43 = vperm.xlu0 %42, %v38
    %v44 = vpop.permute.xlu0 %43
    %47 = vset.pattern.permute.xlu0 0
    %48 = vperm.xlu0 %47, %v39
    %v49 = vpop.permute.xlu0 %48
    %v52 = vlaneseq
    %v53 = vshrl.u32 %v52, 7
    %v54 = vsub.s32 0, %v53
    %v55 = vrot.slane %v40, %v54
    %v57 = vmul.f32 %v44, %v55
    %v58 = vmul.f32 %v49, %v55
    %v59 = vld [vmem:[%s2] sm:$0x1]
    %v61 = vlaneseq
    %v62 = vshrl.u32 %v61, 7
    %v63 = vsub.s32 0, %v62
    %v64 = vrot.slane %v59, %v63
    %v66 = vadd.f32 %v57, %v64
    %v67 = vadd.f32 %v58, %v64
    %v68 = vld [vmem:[%s3] sm:$0x1]
    %vm69 = vcmp.gt.f32.partialorder %v68, 0.5
    %v70 = vand.u32 2147483647, %v66
    %vm71 = vcmp.le.f32.partialorder %v70, 0.7853982
    %vm72 = vcmp.lt.s32.totalorder %v66, 0
    %v73 = vand.u32 %v66, 2139095040
    %v74 = vshrl.u32 %v73, 23
    %v75 = vsub.s32 %v74, 127
    %v76 = vand.u32 2147483647, %v66
    %v77 = vand.u32 %v76, 8388607
    %v78 = vor.u32 %v77, 8388608
    %v79 = vsub.s32 0, %v78
    %v80 = vadd.s32 %v75, 1
    %vm81 = vcmp.gt.s32.totalorder %v80, 0
    %v82 = vsel %vm81, %v80, 0
    %v83 = vshrl.u32 %v82, 5
    %v84 = vand.u32 %v82, 31
    %v85 = vsub.s32 32, %v84
    %v86 = vshrl.u32 683565275, %v85
    %v87 = vshll.u32 683565275, %v84
    %v88 = vshrl.u32 2475754826, %v85
    %v89 = vor.u32 %v87, %v88
    %v90 = vshll.u32 2475754826, %v84
    %v91 = vshrl.u32 2131351028, %v85
    %v92 = vor.u32 %v90, %v91
    %v93 = vshll.u32 2131351028, %v84
    %v94 = vshrl.u32 2102212464, %v85
    %v95 = vor.u32 %v93, %v94
    %v96 = vshll.u32 2102212464, %v84
    %v97 = vshrl.u32 920167782, %v85
    %v98 = vor.u32 %v96, %v97
    %v99 = vshll.u32 920167782, %v84
    %v100 = vshrl.u32 1326507024, %v85
    %v101 = vor.u32 %v99, %v100
    %vm102 = vcmp.lt.s32.totalorder %v83, 1
    %vm103 = vcmp.lt.s32.totalorder %v83, 2
    %vm104 = vcmp.lt.s32.totalorder %v83, 3
    %vm105 = vcmp.lt.s32.totalorder %v83, 4
    %v106 = vsel %vm102, %v86, %v89
    %v107 = vsel %vm105, %v95, 2102212464
    %v108 = vsel %vm104, %v92, %v107
    %v109 = vsel %vm103, %v106, %v108
    %v110 = vsel %vm102, %v89, %v92
    %v111 = vsel %vm105, %v98, 920167782
    %v112 = vsel %vm104, %v95, %v111
    %v113 = vsel %vm103, %v110, %v112
    %v114 = vsel %vm102, %v92, %v95
    %v115 = vsel %vm105, %v101, 1326507024
    %v116 = vsel %vm104, %v98, %v115
    %v117 = vsel %vm103, %v114, %v116
    %v118 = vshll.u32 %v78, 8
    %v119 = vmul.u32.u64.compose %v118, %v117
    %v120 = vextract.low.u32 %v119
    %v121 = vextract.high.u32 %v119
    %v122 = vmul.u32.u64.compose %v118, %v113
    %v123 = vextract.low.u32 %v122
    %v124 = vextract.high.u32 %v122
    %v125 = vmul.u32 %v118, %v109
    %v126 = vadd.s32 %v121, %v123
    %vm127 = vc.u32 %v121, %v123
    %v128 = vadd.s32 %v124, 1
    %v129 = vsel %vm127, %v128, %v124
    %v130 = vadd.s32 %v125, %v129
    %v131 = vadd.s32 %v130, 536870912
    %v132 = vshrl.u32 %v131, 30
    %v133 = vshll.u32 %v132, 30
    %v134 = vsub.s32 %v130, %v133
    %vm135 = vcmp.lt.s32.totalorder %v134, 0
    %v136 = vsub.s32 0, %v134
    %v137 = vsel %vm135, %v136, %v134
    %v138 = vclz %v137
    %v139 = vsub.s32 %v138, 2
    %vm140 = vcmp.gt.s32.totalorder 0, %v139
    %v141 = vsel %vm140, 0, %v139
    %v142 = vsub.s32 32, %v141
    %v143 = vshll.u32 %v134, %v141
    %v144 = vshrl.u32 %v126, %v142
    %v145 = vor.u32 %v143, %v144
    %v146 = vsub.s32 4294967266, %v141
    %v147 = vadd.s32 %v146, 127
    %v148 = vshll.u32 %v147, 23
    %v149 = vor.u32 4788187, %v148
    %v150 = vand.u32 2147483647, %v149
    %v152 = vcvt.s32.f32 %v145
    %v153 = vmul.f32 %v152, %v150
    %v154 = vxor.u32 %v153, 2147483648
    %v155 = vsel %vm72, %v154, %v153
    %v156 = vsub.s32 4, %v132
    %v157 = vsel %vm72, %v156, %v132
    %v158 = vsel %vm71, %v66, %v155
    %v159 = vsel %vm71, 0, %v157
    %v160 = vcosq.f32.pop %v158
    %v161 = vsinq.f32.pop %v158
    %vm162 = vweird.f32 %v66
    %v163 = vadd.s32 %v159, 3
    %v164 = vand.u32 %v163, 3
    %vm165 = vcmp.lt.s32.totalorder %v164, 2
    %vm166 = vcmp.eq.s32.totalorder %v164, 0
    %v167 = vxor.u32 %v161, 2147483648
    %v168 = vsel %vm166, %v160, %v167
    %vm169 = vcmp.eq.s32.totalorder %v164, 2
    %v170 = vxor.u32 %v160, 2147483648
    %v171 = vsel %vm169, %v170, %v161
    %v172 = vsel %vm165, %v168, %v171
    %v173 = vsel %vm162, nan, %v172
    %v174 = vand.u32 2147483647, %v67
    %vm175 = vcmp.le.f32.partialorder %v174, 0.7853982
    %vm176 = vcmp.lt.s32.totalorder %v67, 0
    %v177 = vand.u32 %v67, 2139095040
    %v178 = vshrl.u32 %v177, 23
    %v179 = vsub.s32 %v178, 127
    %v180 = vand.u32 2147483647, %v67
    %v181 = vand.u32 %v180, 8388607
    %v182 = vor.u32 %v181, 8388608
    %v183 = vsub.s32 0, %v182
    %v184 = vadd.s32 %v179, 1
    %vm185 = vcmp.gt.s32.totalorder %v184, 0
    %v186 = vsel %vm185, %v184, 0
    %v187 = vshrl.u32 %v186, 5
    %v188 = vand.u32 %v186, 31
    %v189 = vsub.s32 32, %v188
    %v190 = vshrl.u32 683565275, %v189
    %v191 = vshll.u32 683565275, %v188
    %v192 = vshrl.u32 2475754826, %v189
    %v193 = vor.u32 %v191, %v192
    %v194 = vshll.u32 2475754826, %v188
    %v195 = vshrl.u32 2131351028, %v189
    %v196 = vor.u32 %v194, %v195
    %v197 = vshll.u32 2131351028, %v188
    %v198 = vshrl.u32 2102212464, %v189
    %v199 = vor.u32 %v197, %v198
    %v200 = vshll.u32 2102212464, %v188
    %v201 = vshrl.u32 920167782, %v189
    %v202 = vor.u32 %v200, %v201
    %v203 = vshll.u32 920167782, %v188
    %v204 = vshrl.u32 1326507024, %v189
    %v205 = vor.u32 %v203, %v204
    %vm206 = vcmp.lt.s32.totalorder %v187, 1
    %vm207 = vcmp.lt.s32.totalorder %v187, 2
    %vm208 = vcmp.lt.s32.totalorder %v187, 3
    %vm209 = vcmp.lt.s32.totalorder %v187, 4
    %v210 = vsel %vm206, %v190, %v193
    %v211 = vsel %vm209, %v199, 2102212464
    %v212 = vsel %vm208, %v196, %v211
    %v213 = vsel %vm207, %v210, %v212
    %v214 = vsel %vm206, %v193, %v196
    %v215 = vsel %vm209, %v202, 920167782
    %v216 = vsel %vm208, %v199, %v215
    %v217 = vsel %vm207, %v214, %v216
    %v218 = vsel %vm206, %v196, %v199
    %v219 = vsel %vm209, %v205, 1326507024
    %v220 = vsel %vm208, %v202, %v219
    %v221 = vsel %vm207, %v218, %v220
    %v222 = vshll.u32 %v182, 8
    %v223 = vmul.u32.u64.compose %v222, %v221
    %v224 = vextract.low.u32 %v223
    %v225 = vextract.high.u32 %v223
    %v226 = vmul.u32.u64.compose %v222, %v217
    %v227 = vextract.low.u32 %v226
    %v228 = vextract.high.u32 %v226
    %v229 = vmul.u32 %v222, %v213
    %v230 = vadd.s32 %v225, %v227
    %vm231 = vc.u32 %v225, %v227
    %v232 = vadd.s32 %v228, 1
    %v233 = vsel %vm231, %v232, %v228
    %v234 = vadd.s32 %v229, %v233
    %v235 = vadd.s32 %v234, 536870912
    %v236 = vshrl.u32 %v235, 30
    %v237 = vshll.u32 %v236, 30
    %v238 = vsub.s32 %v234, %v237
    %vm239 = vcmp.lt.s32.totalorder %v238, 0
    %v240 = vsub.s32 0, %v238
    %v241 = vsel %vm239, %v240, %v238
    %v242 = vclz %v241
    %v243 = vsub.s32 %v242, 2
    %vm244 = vcmp.gt.s32.totalorder 0, %v243
    %v245 = vsel %vm244, 0, %v243
    %v246 = vsub.s32 32, %v245
    %v247 = vshll.u32 %v238, %v245
    %v248 = vshrl.u32 %v230, %v246
    %v249 = vor.u32 %v247, %v248
    %v250 = vsub.s32 4294967266, %v245
    %v251 = vadd.s32 %v250, 127
    %v252 = vshll.u32 %v251, 23
    %v253 = vor.u32 4788187, %v252
    %v254 = vand.u32 2147483647, %v253
    %v256 = vcvt.s32.f32 %v249
    %v257 = vmul.f32 %v256, %v254
    %v258 = vxor.u32 %v257, 2147483648
    %v259 = vsel %vm176, %v258, %v257
    %v260 = vsub.s32 4, %v236
    %v261 = vsel %vm176, %v260, %v236
    %v262 = vsel %vm175, %v67, %v259
    %v263 = vsel %vm175, 0, %v261
    %v264 = vcosq.f32.pop %v262
    %v265 = vsinq.f32.pop %v262
    %vm266 = vweird.f32 %v67
    %v267 = vadd.s32 %v263, 3
    %v268 = vand.u32 %v267, 3
    %vm269 = vcmp.lt.s32.totalorder %v268, 2
    %vm270 = vcmp.eq.s32.totalorder %v268, 0
    %v271 = vxor.u32 %v265, 2147483648
    %v272 = vsel %vm270, %v264, %v271
    %vm273 = vcmp.eq.s32.totalorder %v268, 2
    %v274 = vxor.u32 %v264, 2147483648
    %v275 = vsel %vm273, %v274, %v265
    %v276 = vsel %vm269, %v272, %v275
    %v277 = vsel %vm266, nan, %v276
    %v278 = vsel %vm69, 1, 0
    %v279 = vlaneseq
    %v280 = vshrl.u32 %v279, 7
    %v281 = vsub.s32 0, %v280
    %v282 = vrot.slane %v278, %v281
    %vm283 = vcmp.eq.s32.totalorder %v282, 1
    %v284 = vsel %vm283, %v173, %v66
    %v285 = vsel %vm283, %v277, %v67
    %v286 = vld [vmem:[#allocation2] sm:$0xff]
    %v287 = vld [vmem:[#allocation2 + $0x8] sm:$0xff]
    %v288 = vld [vmem:[#allocation2 + $0x10] sm:$0xff]
    %v289 = vld [vmem:[#allocation2 + $0x18] sm:$0xff]
    %v290 = vld [vmem:[#allocation2 + $0x20] sm:$0xff]
    %v291 = vld [vmem:[#allocation2 + $0x28] sm:$0xff]
    %v292 = vld [vmem:[#allocation2 + $0x30] sm:$0xff]
    %v293 = vld [vmem:[#allocation2 + $0x38] sm:$0xff]
    %v294 = vld [vmem:[#allocation2 + $0x40] sm:$0xff]
    %v295 = vld [vmem:[#allocation2 + $0x48] sm:$0xff]
    %v296 = vld [vmem:[#allocation2 + $0x50] sm:$0xff]
    %v297 = vld [vmem:[#allocation2 + $0x58] sm:$0xff]
    %v298 = vld [vmem:[#allocation2 + $0x60] sm:$0xff]
    %v299 = vld [vmem:[#allocation2 + $0x68] sm:$0xff]
    %v300 = vld [vmem:[#allocation2 + $0x70] sm:$0xff]
    %v301 = vld [vmem:[#allocation2 + $0x78] sm:$0xff]
    %v302 = vld [vmem:[%s5] sm:$0x1]
    %v304 = vlaneseq
    %v305 = vshrl.u32 %v304, 7
    %v306 = vsub.s32 0, %v305
    %v307 = vrot.slane %v302, %v306
    %309 = vmatprep.subr.mxu0 0.0
    %310 = vmatpush1.msra.mxu0 %v301
    %311 = vmatprep.subr.mxu0 0.0
    %312 = vmatpush1.msra.mxu0 %v300
    %313 = vmatprep.subr.mxu0 0.0
    %314 = vmatpush1.msra.mxu0 %v299
    %315 = vmatprep.subr.mxu0 0.0
    %316 = vmatpush1.msra.mxu0 %v298
    %317 = vmatprep.subr.mxu0 0.0
    %318 = vmatpush1.msra.mxu0 %v297
    %319 = vmatprep.subr.mxu0 0.0
    %320 = vmatpush1.msra.mxu0 %v296
    %321 = vmatprep.subr.mxu0 0.0
    %322 = vmatpush1.msra.mxu0 %v295
    %323 = vmatprep.subr.mxu0 0.0
    %324 = vmatpush1.msra.mxu0 %v294
    %325 = vmatprep.subr.mxu0 0.0
    %326 = vmatpush1.msra.mxu0 %v293
    %327 = vmatprep.subr.mxu0 0.0
    %328 = vmatpush1.msra.mxu0 %v292
    %329 = vmatprep.subr.mxu0 0.0
    %330 = vmatpush1.msra.mxu0 %v291
    %331 = vmatprep.subr.mxu0 0.0
    %332 = vmatpush1.msra.mxu0 %v290
    %333 = vmatprep.subr.mxu0 0.0
    %334 = vmatpush1.msra.mxu0 %v289
    %335 = vmatprep.subr.mxu0 0.0
    %336 = vmatpush1.msra.mxu0 %v288
    %337 = vmatprep.subr.mxu0 0.0
    %338 = vmatpush1.msra.mxu0 %v287
    %339 = vmatprep.subr.mxu0 0.0
    %340 = vmatpush1.msra.mxu0 %v286
    %341 = vmatprep.subr.mxu0 0.0
    %342 = vmatpush2.msra.mxu0 0.0
    %343 = vmatprep.subr.mxu0 0.0
    %344 = vmatpush2.msra.mxu0 0.0
    %345 = vmatprep.subr.mxu0 0.0
    %346 = vmatpush2.msra.mxu0 0.0
    %347 = vmatprep.subr.mxu0 0.0
    %348 = vmatpush2.msra.mxu0 0.0
    %349 = vmatprep.subr.mxu0 0.0
    %350 = vmatpush2.msra.mxu0 0.0
    %351 = vmatprep.subr.mxu0 0.0
    %352 = vmatpush2.msra.mxu0 0.0
    %353 = vmatprep.subr.mxu0 0.0
    %354 = vmatpush2.msra.mxu0 0.0
    %355 = vmatprep.subr.mxu0 0.0
    %356 = vmatpush2.msra.mxu0 0.0
    %357 = vmatprep.subr.mxu0 0.0
    %358 = vmatpush2.msra.mxu0 0.0
    %359 = vmatprep.subr.mxu0 0.0
    %360 = vmatpush2.msra.mxu0 0.0
    %361 = vmatprep.subr.mxu0 0.0
    %362 = vmatpush2.msra.mxu0 0.0
    %363 = vmatprep.subr.mxu0 0.0
    %364 = vmatpush2.msra.mxu0 0.0
    %365 = vmatprep.subr.mxu0 0.0
    %366 = vmatpush2.msra.mxu0 0.0
    %367 = vmatprep.subr.mxu0 0.0
    %368 = vmatpush2.msra.mxu0 0.0
    %369 = vmatprep.subr.mxu0 0.0
    %370 = vmatpush2.msra.mxu0 0.0
    %371 = vmatprep.subr.mxu0 0.0
    %372 = vmatpush2.msra.mxu0 0.0
    %373 = vmatprep.mubr.f32.mxu0 0.0
    %374 = vmatmul.mubr.f32.gmra.mxu0 %v284
    %v375 = vpop.f32.mrf.mxu0
    %v376 = vadd.f32 %v307, %v375
    %v377 = vpop.f32.mrf.mxu0
    %378 = vmatprep.mubr.f32.mxu0 0.0
    %379 = vmatmul.mubr.f32.gmra.mxu0 %v285
    %v380 = vpop.f32.mrf.mxu0
    %v381 = vadd.f32 %v307, %v380
    %v382 = vpop.f32.mrf.mxu0
    %383 = vdwg.mxu0
    %384 = vst [vmem:[#allocation5] sm:$0xff] %v376
    %385 = vst [vmem:[#allocation5 + $0x8] sm:$0xff] %v381
    // Predicated region
    $region30: #{tpu_custom_call.1} parent=1 // pred_check
      _
    $region31: #{tpu_custom_call.1} parent=1 // pred_check_branch
      %387 = sbr.rel (0) target = $region33
    $region32: #{tpu_custom_call.1} parent=1 // pred_region
      %s389 = ssub.s32 256, 256
      %390 = vsyncadd [#allocation4], %s389
      %s391 = sshll.u32 [#allocation5], 4
      %s392 = int_to_ptr.vmem [resolvable:$true] %s391
      %397 = dma.vmem_to_hbm [thread:$0]  %s392, 256, %s6, [#allocation4], 128, 128, 8
    $region33: #{tpu_custom_call.1} parent=1 // pred_fallthru
      _
    // Predicated region
    $region34: #{tpu_custom_call.1} parent=1 // pred_check
      _
    $region35: #{tpu_custom_call.1} parent=1 // pred_check_branch
      %399 = sbr.rel (0) target = $region37
    $region36: #{tpu_custom_call.1} parent=1 // pred_region
      %400 = dma.done [#allocation4], 256
    $region37: #{tpu_custom_call.1} parent=1 // pred_fallthru
      _
    %401 = vsyncpa [#allocation3], 1
    %402 = vsyncpa [#allocation4], 1

</llo_original>
